<compile_context>
chip_gen: v7x
topology: tpu7x:2x2x1
jax: 0.10.0
libtpu: 0.0.40
codegen_flags: <defaults>
</compile_context>

<pallas_src>
import jax
import jax.numpy as jnp
from jax.experimental import pallas as pl
from jax.experimental.pallas import tpu as pltpu

LN_EPS = 1e-5  # nn.LayerNorm default


def ffn_kernel(x_ref, w1_ref, b1_ref, w2_ref, b2_ref, gamma_ref, beta_ref,
               o_ref, acc_ref):
    k = pl.program_id(1)

    # x in native dtype (bf16 for real models) -> MXU at full rate; f32 accum.
    x = x_ref[...]                                            # [tile_n, d_model]

    # Partial contribution of this d_ffn chunk:
    #   relu(x @ W1[:, chunk] + b1[chunk]) @ W2[chunk, :]
    # ReLU is elementwise over d_ffn, so the computation factorizes per chunk.
    h = jnp.dot(x, w1_ref[...], preferred_element_type=jnp.float32) + b1_ref[...]
    h = jnp.maximum(h, 0.0)
    partial = jnp.dot(h.astype(w2_ref.dtype), w2_ref[...],
                      preferred_element_type=jnp.float32)     # [tile_n, d_model]

    @pl.when(k == 0)
    def _():
        # Fold the residual into the accumulator at the first reduction step.
        acc_ref[...] = x.astype(jnp.float32) + partial

    @pl.when(k > 0)
    def _():
        acc_ref[...] += partial

    @pl.when(k == pl.num_programs(1) - 1)
    def _():
        # Epilogue: add b2 (once), then LayerNorm over d_model, all in f32.
        y = acc_ref[...] + b2_ref[...]
        mean = jnp.mean(y, axis=-1, keepdims=True)
        diff = y - mean
        var = jnp.mean(diff * diff, axis=-1, keepdims=True)
        out = diff * jax.lax.rsqrt(var + LN_EPS) * gamma_ref[...] + beta_ref[...]
        o_ref[...] = out.astype(o_ref.dtype)


def _round_up(x, m):
    return (x + m - 1) // m * m


def _vmem_budget_bytes():
    # Trace-time hardware query; budget ~75% of VMEM, capped at 100 MiB.
    # (v7x: 64 MiB -> ~48 MiB; v5e/v6e: 128 MiB -> ~96-100 MiB.)
    cap = 64 * 1024 * 1024
    try:
        info = pltpu.get_tpu_info()
        cap = int(getattr(info, "vmem_capacity_bytes", cap))
    except Exception:
        pass
    return min(max((cap * 3) // 4, 32 * 1024 * 1024), 100 * 1024 * 1024)


def ffn_forward(tgt, w1, b1, w2, b2, gamma, beta, *, tile_n=256, tk_ffn=512):
    """tgt: [..., d_model]; w1: [d_model, d_ffn]; w2: [d_ffn, d_model]."""
    orig_shape = tgt.shape
    d_model = orig_shape[-1]
    d_ffn = w1.shape[1]

    x = tgt.reshape(-1, d_model)
    n = x.shape[0]

    # Row tile: multiple of 8 sublanes, no bigger than the (padded) row count.
    tile_n = min(_round_up(max(tile_n, 8), 8), _round_up(n, 8))
    n_pad = _round_up(n, tile_n)
    if n_pad != n:
        # Zero-pad tail rows; LayerNorm of a zero row is finite (var=0 ->
        # rsqrt(eps) -> output = beta) and the padded rows are sliced off
        # below.  Keep this invariant if editing the epilogue.
        x = jnp.pad(x, ((0, n_pad - n), (0, 0)))

    # d_ffn chunk (reduction axis): lane-aligned multiple of 128, <= padded
    # d_ffn.  Zero-padded W1 columns / b1 entries give h=relu(0)=0, and the
    # matching zero rows of W2 contribute nothing, so padding is exact.
    tk_ffn = min(_round_up(max(tk_ffn, 128), 128), _round_up(d_ffn, 128))
    ffn_pad = _round_up(d_ffn, tk_ffn)
    if ffn_pad != d_ffn:
        pad = ffn_pad - d_ffn
        w1 = jnp.pad(w1, ((0, 0), (0, pad)))
        b1 = jnp.pad(b1, ((0, pad),))
        w2 = jnp.pad(w2, ((0, pad), (0, 0)))

    # Biases / LN params as [1, C] f32 rows (broadcast over the row tile).
    b1_2d = b1.reshape(1, ffn_pad).astype(jnp.float32)
    b2_2d = b2.reshape(1, d_model).astype(jnp.float32)
    gamma_2d = gamma.reshape(1, d_model).astype(jnp.float32)
    beta_2d = beta.reshape(1, d_model).astype(jnp.float32)

    num_row_tiles = n_pad // tile_n
    num_k = ffn_pad // tk_ffn
    grid = (num_row_tiles, num_k)

    nbytes = lambda a: a.size * a.dtype.itemsize
    cost = pl.CostEstimate(
        flops=2 * 2 * n_pad * d_model * ffn_pad,          # two GEMMs
        transcendentals=n_pad,                            # one rsqrt per row
        bytes_accessed=(2 * nbytes(x)
                        + num_row_tiles * (nbytes(w1) + nbytes(w2) + nbytes(b1_2d))
                        + nbytes(b2_2d) + nbytes(gamma_2d) + nbytes(beta_2d)),
    )

    fn = pl.pallas_call(
        ffn_kernel,
        out_shape=jax.ShapeDtypeStruct((n_pad, d_model), tgt.dtype),
        grid_spec=pltpu.PrefetchScalarGridSpec(
            num_scalar_prefetch=0,
            grid=grid,
            in_specs=[
                # x tile: constant along k -> not re-fetched per k step.
                pl.BlockSpec((tile_n, d_model), lambda i, k: (i, 0)),
                # Streamed weight / b1 chunks (default double-buffered).
                pl.BlockSpec((d_model, tk_ffn), lambda i, k: (0, k)),  # W1
                pl.BlockSpec((1, tk_ffn), lambda i, k: (0, k)),        # b1
                pl.BlockSpec((tk_ffn, d_model), lambda i, k: (k, 0)),  # W2
                # Small constants (constant block index -> fetched once).
                pl.BlockSpec((1, d_model), lambda i, k: (0, 0)),       # b2
                pl.BlockSpec((1, d_model), lambda i, k: (0, 0)),       # gamma
                pl.BlockSpec((1, d_model), lambda i, k: (0, 0)),       # beta
            ],
            out_specs=pl.BlockSpec((tile_n, d_model), lambda i, k: (i, 0)),
            scratch_shapes=[pltpu.VMEM((tile_n, d_model), jnp.float32)],
        ),
        compiler_params=pltpu.CompilerParams(
            dimension_semantics=("parallel", "arbitrary"),
            vmem_limit_bytes=_vmem_budget_bytes(),
        ),
        cost_estimate=cost,
    )

    out = fn(x, w1, b1_2d, w2, b2_2d, gamma_2d, beta_2d)
    return out[:n].reshape(orig_shape)


def ffn_reference(tgt, w1, b1, w2, b2, gamma, beta):
    x = tgt.astype(jnp.float32)
    h = jnp.maximum(x @ w1 + b1, 0.0)
    tgt2 = h @ w2 + b2
    y = x + tgt2
    mean = jnp.mean(y, axis=-1, keepdims=True)
    var = jnp.mean((y - mean) ** 2, axis=-1, keepdims=True)
    return ((y - mean) * jax.lax.rsqrt(var + LN_EPS)) * gamma + beta


if __name__ == "__main__":
    # Small demo shapes; d_model / d_ffn multiples of 128 so blocks are
    # lane-dense.  tk_ffn=128 exercises the streamed-reduction path (2 chunks).
    batch, seq, d_model, d_ffn = 2, 8, 128, 256

    key = jax.random.PRNGKey(0)
    k_x, k_w1, k_b1, k_w2, k_b2 = jax.random.split(key, 5)

    tgt = jax.random.normal(k_x, (batch, seq, d_model), dtype=jnp.float32)

    # nn.Linear-shaped params, stored transposed as [in, out] for x @ W.
    lim1 = 1.0 / jnp.sqrt(d_model)
    lim2 = 1.0 / jnp.sqrt(d_ffn)
    w1 = jax.random.uniform(k_w1, (d_model, d_ffn), minval=-lim1, maxval=lim1)
    b1 = jax.random.uniform(k_b1, (d_ffn,), minval=-lim1, maxval=lim1)
    w2 = jax.random.uniform(k_w2, (d_ffn, d_model), minval=-lim2, maxval=lim2)
    b2 = jax.random.uniform(k_b2, (d_model,), minval=-lim2, maxval=lim2)
    gamma = jnp.ones((d_model,), jnp.float32)   # nn.LayerNorm weight init
    beta = jnp.zeros((d_model,), jnp.float32)   # nn.LayerNorm bias init

    out = ffn_forward(tgt, w1, b1, w2, b2, gamma, beta, tile_n=256, tk_ffn=128)
    out = jax.block_until_ready(out)

    ref = ffn_reference(tgt, w1, b1, w2, b2, gamma, beta)
    assert out.shape == tgt.shape
    # f32 path; tolerance allows for chunked-reduction ordering differences.
    # Loosen further (e.g. 2e-2) when feeding bf16 activations/weights.
    assert jnp.allclose(out, ref, atol=1e-3, rtol=1e-3), "mismatch vs reference"

    print("KERNEL_OK")
</pallas_src>

<mosaic_0001>
module attributes {stable_mosaic.version = 11 : i64} {
  func.func @ffn_kernel(%arg0: i32, %arg1: i32, %arg2: memref<16x128xf32, #tpu.memory_space<vmem>>, %arg3: memref<128x128xf32, #tpu.memory_space<vmem>>, %arg4: memref<1x128xf32, #tpu.memory_space<vmem>>, %arg5: memref<128x128xf32, #tpu.memory_space<vmem>>, %arg6: memref<1x128xf32, #tpu.memory_space<vmem>>, %arg7: memref<1x128xf32, #tpu.memory_space<vmem>>, %arg8: memref<1x128xf32, #tpu.memory_space<vmem>>, %arg9: memref<16x128xf32, #tpu.memory_space<vmem>>, %arg10: memref<16x128xf32, #tpu.memory_space<vmem>>) attributes {dimension_semantics = [#tpu.dimension_semantics<parallel>, #tpu.dimension_semantics<arbitrary>], iteration_bounds = array<i64: 1, 2>, scalar_prefetch = 0 : i64, scratch_operands = 1 : i64, tpu.core_type = #tpu.core_type<tc>, window_params = [{transform_indices = @transform_0, window_bounds = array<i64: 16, 128>}, {transform_indices = @transform_1, window_bounds = array<i64: 128, 128>}, {transform_indices = @transform_2, window_bounds = array<i64: 1, 128>}, {transform_indices = @transform_3, window_bounds = array<i64: 128, 128>}, {pipeline_mode = #tpu.pipeline_mode<synchronous>, transform_indices = @transform_4, window_bounds = array<i64: 1, 128>}, {pipeline_mode = #tpu.pipeline_mode<synchronous>, transform_indices = @transform_5, window_bounds = array<i64: 1, 128>}, {pipeline_mode = #tpu.pipeline_mode<synchronous>, transform_indices = @transform_6, window_bounds = array<i64: 1, 128>}, {transform_indices = @transform_7, window_bounds = array<i64: 16, 128>}]} {
    %c0 = arith.constant 0 : index
    %c0_0 = arith.constant 0 : index
    %0 = vector.load %arg2[%c0, %c0_0] : memref<16x128xf32, #tpu.memory_space<vmem>>, vector<16x128xf32>
    %c0_1 = arith.constant 0 : index
    %c0_2 = arith.constant 0 : index
    %1 = vector.load %arg3[%c0_1, %c0_2] : memref<128x128xf32, #tpu.memory_space<vmem>>, vector<128x128xf32>
    %cst = arith.constant dense<0.000000e+00> : vector<16x128xf32>
    %2 = tpu.matmul %0, %1, %cst {dimension_numbers = #tpu.dot_dimension_numbers<[1], [0], [0], [1], [0, 0, 1, 1], [], []>} : vector<16x128xf32>, vector<128x128xf32>, vector<16x128xf32> -> vector<16x128xf32>
    %c0_3 = arith.constant 0 : index
    %c0_4 = arith.constant 0 : index
    %3 = vector.load %arg4[%c0_3, %c0_4] : memref<1x128xf32, #tpu.memory_space<vmem>>, vector<1x128xf32>
    %4 = vector.broadcast %3 : vector<1x128xf32> to vector<16x128xf32>
    %5 = arith.addf %2, %4 : vector<16x128xf32>
    %cst_5 = arith.constant 0.000000e+00 : f32
    %6 = vector.broadcast %cst_5 : f32 to vector<16x128xf32>
    %7 = arith.maximumf %5, %6 : vector<16x128xf32>
    %c0_6 = arith.constant 0 : index
    %c0_7 = arith.constant 0 : index
    %8 = vector.load %arg5[%c0_6, %c0_7] : memref<128x128xf32, #tpu.memory_space<vmem>>, vector<128x128xf32>
    %cst_8 = arith.constant dense<0.000000e+00> : vector<16x128xf32>
    %9 = tpu.matmul %7, %8, %cst_8 {dimension_numbers = #tpu.dot_dimension_numbers<[1], [0], [0], [1], [0, 0, 1, 1], [], []>} : vector<16x128xf32>, vector<128x128xf32>, vector<16x128xf32> -> vector<16x128xf32>
    %c0_i32 = arith.constant 0 : i32
    %10 = arith.cmpi eq, %arg1, %c0_i32 : i32
    %11 = arith.extui %10 : i1 to i32
    %c0_i32_9 = arith.constant 0 : i32
    %12 = arith.cmpi ne, %11, %c0_i32_9 : i32
    scf.if %12 {
      %19 = arith.addf %0, %9 : vector<16x128xf32>
      %c0_13 = arith.constant 0 : index
      %c0_14 = arith.constant 0 : index
      %20 = vector.load %arg10[%c0_13, %c0_14] : memref<16x128xf32, #tpu.memory_space<vmem>>, vector<16x128xf32>
      tpu.vector_store %arg10[%c0_13, %c0_14], %19 {strides = array<i32>} : memref<16x128xf32, #tpu.memory_space<vmem>>, vector<16x128xf32>,
    } else {
    }
    %c0_i32_10 = arith.constant 0 : i32
    %13 = arith.cmpi sgt, %arg1, %c0_i32_10 : i32
    %14 = arith.extui %13 : i1 to i32
    %c0_i32_11 = arith.constant 0 : i32
    %15 = arith.cmpi ne, %14, %c0_i32_11 : i32
    scf.if %15 {
      %c0_13 = arith.constant 0 : index
      %c0_14 = arith.constant 0 : index
      %19 = vector.load %arg10[%c0_13, %c0_14] : memref<16x128xf32, #tpu.memory_space<vmem>>, vector<16x128xf32>
      %20 = arith.addf %19, %9 : vector<16x128xf32>
      %c0_15 = arith.constant 0 : index
      %c0_16 = arith.constant 0 : index
      %21 = vector.load %arg10[%c0_15, %c0_16] : memref<16x128xf32, #tpu.memory_space<vmem>>, vector<16x128xf32>
      tpu.vector_store %arg10[%c0_15, %c0_16], %20 {strides = array<i32>} : memref<16x128xf32, #tpu.memory_space<vmem>>, vector<16x128xf32>,
    } else {
    }
    %c1_i32 = arith.constant 1 : i32
    %16 = arith.cmpi eq, %arg1, %c1_i32 : i32
    %17 = arith.extui %16 : i1 to i32
    %c0_i32_12 = arith.constant 0 : i32
    %18 = arith.cmpi ne, %17, %c0_i32_12 : i32
    scf.if %18 {
      %c0_13 = arith.constant 0 : index
      %c0_14 = arith.constant 0 : index
      %19 = vector.load %arg10[%c0_13, %c0_14] : memref<16x128xf32, #tpu.memory_space<vmem>>, vector<16x128xf32>
      %c0_15 = arith.constant 0 : index
      %c0_16 = arith.constant 0 : index
      %20 = vector.load %arg6[%c0_15, %c0_16] : memref<1x128xf32, #tpu.memory_space<vmem>>, vector<1x128xf32>
      %21 = vector.broadcast %20 : vector<1x128xf32> to vector<16x128xf32>
      %22 = arith.addf %19, %21 : vector<16x128xf32>
      %cst_17 = arith.constant dense<0.000000e+00> : vector<16xf32>
      %23 = vector.multi_reduction <add>, %22, %cst_17 [1] : vector<16x128xf32> to vector<16xf32>
      %24 = vector.shape_cast %23 : vector<16xf32> to vector<16x1xf32>
      %cst_18 = arith.constant 1.280000e+02 : f32
      %25 = vector.broadcast %cst_18 : f32 to vector<16x1xf32>
      %26 = arith.divf %24, %25 : vector<16x1xf32>
      %27 = vector.broadcast %26 : vector<16x1xf32> to vector<16x128xf32>
      %28 = arith.subf %22, %27 : vector<16x128xf32>
      %29 = arith.mulf %28, %28 : vector<16x128xf32>
      %cst_19 = arith.constant dense<0.000000e+00> : vector<16xf32>
      %30 = vector.multi_reduction <add>, %29, %cst_19 [1] : vector<16x128xf32> to vector<16xf32>
      %31 = vector.shape_cast %30 : vector<16xf32> to vector<16x1xf32>
      %cst_20 = arith.constant 1.280000e+02 : f32
      %32 = vector.broadcast %cst_20 : f32 to vector<16x1xf32>
      %33 = arith.divf %31, %32 : vector<16x1xf32>
      %cst_21 = arith.constant 9.99999974E-6 : f32
      %34 = vector.broadcast %cst_21 : f32 to vector<16x1xf32>
      %35 = arith.addf %33, %34 : vector<16x1xf32>
      %36 = math.rsqrt %35 : vector<16x1xf32>
      %37 = vector.broadcast %36 : vector<16x1xf32> to vector<16x128xf32>
      %38 = arith.mulf %28, %37 : vector<16x128xf32>
      %c0_22 = arith.constant 0 : index
      %c0_23 = arith.constant 0 : index
      %39 = vector.load %arg7[%c0_22, %c0_23] : memref<1x128xf32, #tpu.memory_space<vmem>>, vector<1x128xf32>
      %40 = vector.broadcast %39 : vector<1x128xf32> to vector<16x128xf32>
      %41 = arith.mulf %38, %40 : vector<16x128xf32>
      %c0_24 = arith.constant 0 : index
      %c0_25 = arith.constant 0 : index
      %42 = vector.load %arg8[%c0_24, %c0_25] : memref<1x128xf32, #tpu.memory_space<vmem>>, vector<1x128xf32>
      %43 = vector.broadcast %42 : vector<1x128xf32> to vector<16x128xf32>
      %44 = arith.addf %41, %43 : vector<16x128xf32>
      %c0_26 = arith.constant 0 : index
      %c0_27 = arith.constant 0 : index
      %45 = vector.load %arg9[%c0_26, %c0_27] : memref<16x128xf32, #tpu.memory_space<vmem>>, vector<16x128xf32>
      tpu.vector_store %arg9[%c0_26, %c0_27], %44 {strides = array<i32>} : memref<16x128xf32, #tpu.memory_space<vmem>>, vector<16x128xf32>,
    } else {
    }
    return
  }
  func.func @transform_0(%arg0: i32, %arg1: i32) -> (i32, i32) {
    %c0_i32 = arith.constant 0 : i32
    %c0_i32_0 = arith.constant 0 : i32
    return %arg0, %c0_i32 : i32, i32
  }
  func.func @transform_1(%arg0: i32, %arg1: i32) -> (i32, i32) {
    %c0_i32 = arith.constant 0 : i32
    %c0_i32_0 = arith.constant 0 : i32
    return %c0_i32, %arg1 : i32, i32
  }
  func.func @transform_2(%arg0: i32, %arg1: i32) -> (i32, i32) {
    %c0_i32 = arith.constant 0 : i32
    %c0_i32_0 = arith.constant 0 : i32
    return %c0_i32, %arg1 : i32, i32
  }
  func.func @transform_3(%arg0: i32, %arg1: i32) -> (i32, i32) {
    %c0_i32 = arith.constant 0 : i32
    %c0_i32_0 = arith.constant 0 : i32
    return %arg1, %c0_i32 : i32, i32
  }
  func.func @transform_4(%arg0: i32, %arg1: i32) -> (i32, i32) {
    %c0_i32 = arith.constant 0 : i32
    %c0_i32_0 = arith.constant 0 : i32
    %c0_i32_1 = arith.constant 0 : i32
    return %c0_i32, %c0_i32_0 : i32, i32
  }
  func.func @transform_5(%arg0: i32, %arg1: i32) -> (i32, i32) {
    %c0_i32 = arith.constant 0 : i32
    %c0_i32_0 = arith.constant 0 : i32
    %c0_i32_1 = arith.constant 0 : i32
    return %c0_i32, %c0_i32_0 : i32, i32
  }
  func.func @transform_6(%arg0: i32, %arg1: i32) -> (i32, i32) {
    %c0_i32 = arith.constant 0 : i32
    %c0_i32_0 = arith.constant 0 : i32
    %c0_i32_1 = arith.constant 0 : i32
    return %c0_i32, %c0_i32_0 : i32, i32
  }
  func.func @transform_7(%arg0: i32, %arg1: i32) -> (i32, i32) {
    %c0_i32 = arith.constant 0 : i32
    %c0_i32_0 = arith.constant 0 : i32
    return %arg0, %c0_i32 : i32, i32
  }
}

</mosaic_0001>

<llo_original>
// kernel: tpu_custom_call.1
$region0: #{tpu_custom_call.1}
  #allocation0 [shape = 'u32[]', space=smem, size = 0x4, offset = 0x4, fixed_abs, tag = 'smem constant byte address 0x4 - core index']
  #allocation1 [shape = 'u32[144,128]{1,0:T(1,128)}', space=vmem, size = 0x12000, scoped, tag = 'internal scratch']
  #allocation2 [shape = 'f32[16,128]{1,0:T(8,128)}', space=vmem, size = 0x2000, scoped, tag = 'scratch operand']
  %s0 = inlined_call_operand.hbm [shape: f32[16,128], index: 0, kind: input, shape index: {}]
  %s1 = inlined_call_operand.hbm [shape: f32[128,256], index: 1, kind: input, shape index: {}]
  %s2 = inlined_call_operand.vmem [shape: f32[1,256], index: 2, kind: input, shape index: {}]
  %s3 = inlined_call_operand.hbm [shape: f32[256,128], index: 3, kind: input, shape index: {}]
  %s4 = inlined_call_operand.vmem [shape: f32[1,128], index: 4, kind: input, shape index: {}]
  %s5 = inlined_call_operand.vmem [shape: f32[1,128], index: 5, kind: input, shape index: {}]
  %s6 = inlined_call_operand.vmem [shape: f32[1,128], index: 6, kind: input, shape index: {}]
  %s7 = inlined_call_operand.hbm [shape: f32[16,128], index: 7, kind: output, shape index: {}]
  %s8 = sld [smem:[#allocation0]]
  $region85: #{tpu_custom_call.1} parent=0
    _
  %s10 = ssub.s32 1, %s8
  %s11 = scalar_select 0, %s10, %s8
  $region1: #{tpu_custom_call.1} parent=0
    #allocation3 [shape = 'u8[8192]{0}', space=vmem, size = 0x2000, scoped, tag = 'input window, operand 0, single buffered']
    #allocation4 [shape = 's32[2]{0}', space=sflag, size = 0x8, scoped, tag = 'scoped memory for tpu_custom_call.1']
    #allocation5 [shape = 's32[2]{0}', space=sflag, size = 0x8, scoped, tag = 'scoped memory for tpu_custom_call.1']
    #allocation6 [shape = 'u8[131072]{0}', space=vmem, size = 0x20000, scoped, tag = 'input window, operand 1']
    #allocation7 [shape = 's32[2]{0}', space=sflag, size = 0x8, scoped, tag = 'scoped memory for tpu_custom_call.1']
    #allocation8 [shape = 'u8[131072]{0}', space=vmem, size = 0x20000, scoped, tag = 'input window, operand 3']
    #allocation9 [shape = 'u8[8192]{0}', space=vmem, size = 0x2000, scoped, tag = 'output window, operand 0, single buffered']
    %12 = vsyncpa [#allocation4], 0
    %13 = vsyncpa [#allocation7], 0
    %s14 = scalar_lea.sflag [#allocation7], 1
    %15 = vsyncpa %s14, 0
    %16 = vsyncpa [#allocation5], 0
    loop: start=0, step=1, limit=4
    $region2: #{tpu_custom_call.1} parent=1 // loop_pre_header
      _
    $region3: #{tpu_custom_call.1} parent=1 // loop_header
      %s18 = sphi 0, %s22
      %p19 = scmp.ge.s32.totalorder %s18, 4
      %s25 = sphi 0, %s37
      %s26 = sphi 0, %s33
      %s27 = sphi 0, %s25
      %s28 = sphi 0, %s26
      %s29 = sphi 0, %s27
      %s30 = sphi 0, %s28
      %s40 = sphi 0, %s42
      %s43 = sphi 0, %s40
      %s44 = sphi 0, %s43
      %s60 = sphi 0, %s44
      %s66 = sphi 0, %s68
      %s69 = sphi 0, %s66
      %s70 = sphi 0, %s69
      %s86 = sphi 0, %s70
      %s92 = sphi 0, %s94
      %s95 = sphi 0, %s92
      %s96 = sphi 0, %s95
      %s112 = sphi 0, %s96
      %s118 = sphi 0, %s120
      %s121 = sphi 0, %s118
      %s122 = sphi 0, %s121
      %s138 = sphi 0, %s122
      %s142 = sphi 0, %s142
      %s144 = sphi 0, %s142
      %s145 = sphi 0, %s144
      %s159 = sphi 0, %s145
      %s163 = sphi 0, %s163
      %s165 = sphi 0, %s163
      %s166 = sphi 0, %s165
      %s180 = sphi 0, %s166
      %s184 = sphi 0, %s184
      %s186 = sphi 0, %s184
      %s187 = sphi 0, %s186
      %s201 = sphi 0, %s187
      %s207 = sphi 0, %s209
      %s210 = sphi 0, %s207
      %s211 = sphi 0, %s210
      %s227 = sphi 0, %s211
    $region4: #{tpu_custom_call.1} parent=1 // loop_header_branch
      %21 = sbr.rel (%p19) target = $region8
    $region5: #{tpu_custom_call.1} parent=1 // loop_body
      %s23 = ssub.s32 %s18, 1
      %s24 = ssub.s32 %s18, 2
      %s31 = sadd.s32 1, %s26
      %p32 = scmp.ge.s32.totalorder %s31, 2
      %s33 = scalar_select %p32, 0, %s31
      %s34 = sadd.s32 1, %s25
      %s35 = scalar_select %p32, %s34, %s25
      %p36 = scmp.ge.s32.totalorder %s35, 1
      %s37 = scalar_select %p36, 0, %s35
      %s38 = ssub.s32 %s25, %s37
      %p39 = scmp.eq.s32.totalorder %s38, 0
      %s41 = sadd.s32 %s40, 1
      %s42 = scalar_select %p39, %s40, %s41
      %p45 = pneg %p39
      %p46 = scmp.eq.s32.totalorder %s18, 1
      %p47 = por %p45, %p46
      %p48 = scmp.ne.s32.totalorder %s40, %s43
      %p49 = scmp.eq.s32.totalorder %s18, 0
      %p50 = por %p48, %p49
      %p51 = scmp.ne.s32.totalorder %s40, %s43
      %p52 = scmp.eq.s32.totalorder %s23, 1
      %p53 = por %p51, %p52
      %p54 = scmp.ne.s32.totalorder %s43, %s44
      %p55 = scmp.eq.s32.totalorder %s23, 0
      %p56 = por %p54, %p55
      %p57 = scmp.ne.s32.totalorder %s43, %s44
      %p58 = scmp.eq.s32.totalorder %s24, 1
      %p59 = por %p57, %p58
      %p61 = scmp.ne.s32.totalorder %s44, %s60
      %p62 = scmp.eq.s32.totalorder %s24, 0
      %p63 = por %p61, %p62
      %s64 = ssub.s32 %s26, %s33
      %p65 = scmp.eq.s32.totalorder %s64, 0
      %s67 = sadd.s32 %s66, 1
      %s68 = scalar_select %p65, %s66, %s67
      %p71 = pneg %p65
      %p72 = scmp.eq.s32.totalorder %s18, 1
      %p73 = por %p71, %p72
      %p74 = scmp.ne.s32.totalorder %s66, %s69
      %p75 = scmp.eq.s32.totalorder %s18, 0
      %p76 = por %p74, %p75
      %p77 = scmp.ne.s32.totalorder %s66, %s69
      %p78 = scmp.eq.s32.totalorder %s23, 1
      %p79 = por %p77, %p78
      %p80 = scmp.ne.s32.totalorder %s69, %s70
      %p81 = scmp.eq.s32.totalorder %s23, 0
      %p82 = por %p80, %p81
      %p83 = scmp.ne.s32.totalorder %s69, %s70
      %p84 = scmp.eq.s32.totalorder %s24, 1
      %p85 = por %p83, %p84
      %p87 = scmp.ne.s32.totalorder %s70, %s86
      %p88 = scmp.eq.s32.totalorder %s24, 0
      %p89 = por %p87, %p88
      %s90 = ssub.s32 %s26, %s33
      %p91 = scmp.eq.s32.totalorder %s90, 0
      %s93 = sadd.s32 %s92, 1
      %s94 = scalar_select %p91, %s92, %s93
      %p97 = pneg %p91
      %p98 = scmp.eq.s32.totalorder %s18, 1
      %p99 = por %p97, %p98
      %p100 = scmp.ne.s32.totalorder %s92, %s95
      %p101 = scmp.eq.s32.totalorder %s18, 0
      %p102 = por %p100, %p101
      %p103 = scmp.ne.s32.totalorder %s92, %s95
      %p104 = scmp.eq.s32.totalorder %s23, 1
      %p105 = por %p103, %p104
      %p106 = scmp.ne.s32.totalorder %s95, %s96
      %p107 = scmp.eq.s32.totalorder %s23, 0
      %p108 = por %p106, %p107
      %p109 = scmp.ne.s32.totalorder %s95, %s96
      %p110 = scmp.eq.s32.totalorder %s24, 1
      %p111 = por %p109, %p110
      %p113 = scmp.ne.s32.totalorder %s96, %s112
      %p114 = scmp.eq.s32.totalorder %s24, 0
      %p115 = por %p113, %p114
      %s116 = ssub.s32 %s26, %s33
      %p117 = scmp.eq.s32.totalorder %s116, 0
      %s119 = sadd.s32 %s118, 1
      %s120 = scalar_select %p117, %s118, %s119
      %p123 = pneg %p117
      %p124 = scmp.eq.s32.totalorder %s18, 1
      %p125 = por %p123, %p124
      %p126 = scmp.ne.s32.totalorder %s118, %s121
      %p127 = scmp.eq.s32.totalorder %s18, 0
      %p128 = por %p126, %p127
      %p129 = scmp.ne.s32.totalorder %s118, %s121
      %p130 = scmp.eq.s32.totalorder %s23, 1
      %p131 = por %p129, %p130
      %p132 = scmp.ne.s32.totalorder %s121, %s122
      %p133 = scmp.eq.s32.totalorder %s23, 0
      %p134 = por %p132, %p133
      %p135 = scmp.ne.s32.totalorder %s121, %s122
      %p136 = scmp.eq.s32.totalorder %s24, 1
      %p137 = por %p135, %p136
      %p139 = scmp.ne.s32.totalorder %s122, %s138
      %p140 = scmp.eq.s32.totalorder %s24, 0
      %p141 = por %p139, %p140
      %s143 = sadd.s32 %s142, 1
      %p146 = scmp.eq.s32.totalorder %s18, 1
      %p147 = scmp.ne.s32.totalorder %s142, %s144
      %p148 = scmp.eq.s32.totalorder %s18, 0
      %p149 = por %p147, %p148
      %p150 = scmp.ne.s32.totalorder %s142, %s144
      %p151 = scmp.eq.s32.totalorder %s23, 1
      %p152 = por %p150, %p151
      %p153 = scmp.ne.s32.totalorder %s144, %s145
      %p154 = scmp.eq.s32.totalorder %s23, 0
      %p155 = por %p153, %p154
      %p156 = scmp.ne.s32.totalorder %s144, %s145
      %p157 = scmp.eq.s32.totalorder %s24, 1
      %p158 = por %p156, %p157
      %p160 = scmp.ne.s32.totalorder %s145, %s159
      %p161 = scmp.eq.s32.totalorder %s24, 0
      %p162 = por %p160, %p161
      %s164 = sadd.s32 %s163, 1
      %p167 = scmp.eq.s32.totalorder %s18, 1
      %p168 = scmp.ne.s32.totalorder %s163, %s165
      %p169 = scmp.eq.s32.totalorder %s18, 0
      %p170 = por %p168, %p169
      %p171 = scmp.ne.s32.totalorder %s163, %s165
      %p172 = scmp.eq.s32.totalorder %s23, 1
      %p173 = por %p171, %p172
      %p174 = scmp.ne.s32.totalorder %s165, %s166
      %p175 = scmp.eq.s32.totalorder %s23, 0
      %p176 = por %p174, %p175
      %p177 = scmp.ne.s32.totalorder %s165, %s166
      %p178 = scmp.eq.s32.totalorder %s24, 1
      %p179 = por %p177, %p178
      %p181 = scmp.ne.s32.totalorder %s166, %s180
      %p182 = scmp.eq.s32.totalorder %s24, 0
      %p183 = por %p181, %p182
      %s185 = sadd.s32 %s184, 1
      %p188 = scmp.eq.s32.totalorder %s18, 1
      %p189 = scmp.ne.s32.totalorder %s184, %s186
      %p190 = scmp.eq.s32.totalorder %s18, 0
      %p191 = por %p189, %p190
      %p192 = scmp.ne.s32.totalorder %s184, %s186
      %p193 = scmp.eq.s32.totalorder %s23, 1
      %p194 = por %p192, %p193
      %p195 = scmp.ne.s32.totalorder %s186, %s187
      %p196 = scmp.eq.s32.totalorder %s23, 0
      %p197 = por %p195, %p196
      %p198 = scmp.ne.s32.totalorder %s186, %s187
      %p199 = scmp.eq.s32.totalorder %s24, 1
      %p200 = por %p198, %p199
      %p202 = scmp.ne.s32.totalorder %s187, %s201
      %p203 = scmp.eq.s32.totalorder %s24, 0
      %p204 = por %p202, %p203
      %s205 = ssub.s32 %s25, %s37
      %p206 = scmp.eq.s32.totalorder %s205, 0
      %s208 = sadd.s32 %s207, 1
      %s209 = scalar_select %p206, %s207, %s208
      %p212 = pneg %p206
      %p213 = scmp.eq.s32.totalorder %s18, 1
      %p214 = por %p212, %p213
      %p215 = scmp.ne.s32.totalorder %s207, %s210
      %p216 = scmp.eq.s32.totalorder %s18, 0
      %p217 = por %p215, %p216
      %p218 = scmp.ne.s32.totalorder %s207, %s210
      %p219 = scmp.eq.s32.totalorder %s23, 1
      %p220 = por %p218, %p219
      %p221 = scmp.ne.s32.totalorder %s210, %s211
      %p222 = scmp.eq.s32.totalorder %s23, 0
      %p223 = por %p221, %p222
      %p224 = scmp.ne.s32.totalorder %s210, %s211
      %p225 = scmp.eq.s32.totalorder %s24, 1
      %p226 = por %p224, %p225
      %p228 = scmp.ne.s32.totalorder %s211, %s227
      %p229 = scmp.eq.s32.totalorder %s24, 0
      %p230 = por %p228, %p229
      %p231 = scmp.le.s32.totalorder 1, %s18
      %p232 = scmp.lt.s32.totalorder %s18, 3
      %p233 = pnand %p231, %p232
      %p234 = pneg %p233
      // Predicated region
      $region9: #{tpu_custom_call.1} parent=5 // pred_check
        _
      $region10: #{tpu_custom_call.1} parent=5 // pred_check_branch
        %236 = sbr.rel (%p233) target = $region12
      $region11: #{tpu_custom_call.1} parent=5 // pred_region
        %s237 = ssub.s32 %s18, 1
        // Predicated region
        $region13: #{tpu_custom_call.1} parent=11 // pred_check
          %p238 = pneg %p56
        $region14: #{tpu_custom_call.1} parent=11 // pred_check_branch
          %240 = sbr.rel (%p238) target = $region16
        $region15: #{tpu_custom_call.1} parent=11 // pred_region
          %s241 = smul.u32 2, %s27
          %s243 = ssub.s32 256, 256
          %244 = vsyncadd [#allocation4], %s243
          %s245 = smul.addr %s241, 128
          %s246 = scalar_lea.hbm %s0, %s245
          %s247 = sshll.u32 [#allocation3], 4
          %s248 = int_to_ptr.vmem [resolvable:$true] %s247
          %253 = dma.hbm_to_vmem [thread:$0]  %s246, 256, %s248, [#allocation4], 128, 128, 8
        $region16: #{tpu_custom_call.1} parent=11 // pred_fallthru
          _
        // Predicated region
        $region17: #{tpu_custom_call.1} parent=11 // pred_check
          %p254 = pneg %p155
        $region18: #{tpu_custom_call.1} parent=11 // pred_check_branch
          %256 = sbr.rel (%p254) target = $region20
        $region19: #{tpu_custom_call.1} parent=11 // pred_region
          _
        $region20: #{tpu_custom_call.1} parent=11 // pred_fallthru
          _
        // Predicated region
        $region21: #{tpu_custom_call.1} parent=11 // pred_check
          %p257 = pneg %p176
        $region22: #{tpu_custom_call.1} parent=11 // pred_check_branch
          %259 = sbr.rel (%p257) target = $region24
        $region23: #{tpu_custom_call.1} parent=11 // pred_region
          _
        $region24: #{tpu_custom_call.1} parent=11 // pred_fallthru
          _
        // Predicated region
        $region25: #{tpu_custom_call.1} parent=11 // pred_check
          %p260 = pneg %p197
        $region26: #{tpu_custom_call.1} parent=11 // pred_check_branch
          %262 = sbr.rel (%p260) target = $region28
        $region27: #{tpu_custom_call.1} parent=11 // pred_region
          _
        $region28: #{tpu_custom_call.1} parent=11 // pred_fallthru
          _
      $region12: #{tpu_custom_call.1} parent=5 // pred_fallthru
        _
      %p263 = scmp.lt.s32.totalorder %s18, 2
      // Predicated region
      $region29: #{tpu_custom_call.1} parent=5 // pred_check
        %p264 = pneg %p263
      $region30: #{tpu_custom_call.1} parent=5 // pred_check_branch
        %266 = sbr.rel (%p264) target = $region32
      $region31: #{tpu_custom_call.1} parent=5 // pred_region
        // Predicated region
        $region33: #{tpu_custom_call.1} parent=31 // pred_check
          %p267 = pneg %p76
        $region34: #{tpu_custom_call.1} parent=31 // pred_check_branch
          %269 = sbr.rel (%p267) target = $region36
        $region35: #{tpu_custom_call.1} parent=31 // pred_region
          %s270 = sand.u32 %s18, 1
          %s271 = scalar_lea.sflag [#allocation7], %s270
          %s272 = sand.u32 %s66, 1
          %s273 = smul.addr %s272, 128
          %s274 = scalar_lea.vmem [#allocation6], %s273
          %s276 = ssub.s32 2048, 2048
          %277 = vsyncadd %s271, %s276
          %s278 = smul.addr %s26, 128
          %s279 = scalar_lea.hbm %s1, %s278
          %s280 = sshll.u32 %s274, 4
          %s281 = int_to_ptr.vmem [resolvable:$true] %s280
          %286 = dma.hbm_to_vmem [thread:$0]  %s279, 2048, %s281, %s271, 256, 128, 8
        $region36: #{tpu_custom_call.1} parent=31 // pred_fallthru
          _
        // Predicated region
        $region37: #{tpu_custom_call.1} parent=31 // pred_check
          %p287 = pneg %p102
        $region38: #{tpu_custom_call.1} parent=31 // pred_check_branch
          %289 = sbr.rel (%p287) target = $region40
        $region39: #{tpu_custom_call.1} parent=31 // pred_region
          %p290 = scmp.lt.s32.totalorder %s26, 1
          %s291 = scalar_select %p290, %s26, 1
          %s292 = scalar_lea.vmem %s2, %s291
        $region40: #{tpu_custom_call.1} parent=31 // pred_fallthru
          _
        // Predicated region
        $region41: #{tpu_custom_call.1} parent=31 // pred_check
          %p293 = pneg %p128
        $region42: #{tpu_custom_call.1} parent=31 // pred_check_branch
          %295 = sbr.rel (%p293) target = $region44
        $region43: #{tpu_custom_call.1} parent=31 // pred_region
          %s296 = sand.u32 %s18, 1
          %s297 = scalar_lea.sflag [#allocation7], %s296
          %s298 = sand.u32 %s118, 1
          %s299 = smul.addr %s298, 128
          %s300 = scalar_lea.vmem [#allocation8], %s299
          %s301 = smul.u32 16, %s26
          %s303 = ssub.s32 2048, 2048
          %304 = vsyncadd %s297, %s303
          %s305 = smul.addr %s301, 128
          %s306 = scalar_lea.hbm %s3, %s305
          %s307 = sshll.u32 %s300, 4
          %s308 = int_to_ptr.vmem [resolvable:$true] %s307
          %313 = dma.hbm_to_vmem [thread:$0]  %s306, 2048, %s308, %s297, 128, 128, 8
        $region44: #{tpu_custom_call.1} parent=31 // pred_fallthru
          _
      $region32: #{tpu_custom_call.1} parent=5 // pred_fallthru
        _
      %p314 = scmp.le.s32.totalorder 1, %s18
      %p315 = scmp.lt.s32.totalorder %s18, 3
      %p316 = pnand %p314, %p315
      %p317 = pneg %p316
      // Predicated region
      $region45: #{tpu_custom_call.1} parent=5 // pred_check
        _
      $region46: #{tpu_custom_call.1} parent=5 // pred_check_branch
        %319 = sbr.rel (%p316) target = $region48
      $region47: #{tpu_custom_call.1} parent=5 // pred_region
        %s320 = ssub.s32 %s18, 1
        // Predicated region
        $region49: #{tpu_custom_call.1} parent=47 // pred_check
          %p321 = pneg %p56
        $region50: #{tpu_custom_call.1} parent=47 // pred_check_branch
          %323 = sbr.rel (%p321) target = $region52
        $region51: #{tpu_custom_call.1} parent=47 // pred_region
          %324 = dma.done [#allocation4], 256
        $region52: #{tpu_custom_call.1} parent=47 // pred_fallthru
          _
        %s325 = sand.u32 %s23, 1
        %s326 = scalar_lea.sflag [#allocation7], %s325
        %s327 = sand.u32 %s69, 1
        %s328 = smul.addr %s327, 128
        %s329 = scalar_lea.vmem [#allocation6], %s328
        // Predicated region
        $region53: #{tpu_custom_call.1} parent=47 // pred_check
          %p330 = pneg %p82
        $region54: #{tpu_custom_call.1} parent=47 // pred_check_branch
          %332 = sbr.rel (%p330) target = $region56
        $region55: #{tpu_custom_call.1} parent=47 // pred_region
          %333 = dma.done %s326, 2048
        $region56: #{tpu_custom_call.1} parent=47 // pred_fallthru
          _
        %s334 = sand.u32 %s23, 1
        %s335 = scalar_lea.sflag [#allocation7], %s334
        %s336 = sand.u32 %s121, 1
        %s337 = smul.addr %s336, 128
        %s338 = scalar_lea.vmem [#allocation8], %s337
        // Predicated region
        $region57: #{tpu_custom_call.1} parent=47 // pred_check
          %p339 = pneg %p134
        $region58: #{tpu_custom_call.1} parent=47 // pred_check_branch
          %341 = sbr.rel (%p339) target = $region60
        $region59: #{tpu_custom_call.1} parent=47 // pred_region
          %342 = dma.done %s335, 2048
        $region60: #{tpu_custom_call.1} parent=47 // pred_fallthru
          _
        %p343 = pneg %p56
        %p344 = pneg %p53
        %s345 = sand.u32 %s23, 1
        %s346 = scalar_lea.sflag [#allocation7], %s345
        %s347 = sand.u32 %s69, 1
        %s348 = smul.addr %s347, 128
        %s349 = scalar_lea.vmem [#allocation6], %s348
        %p350 = pneg %p82
        %p351 = pneg %p79
        %p352 = scmp.lt.s32.totalorder %s28, 1
        %s353 = scalar_select %p352, %s28, 1
        %s354 = scalar_lea.vmem %s2, %s353
        %p355 = pneg %p108
        %p356 = pneg %p105
        %s357 = sand.u32 %s23, 1
        %s358 = scalar_lea.sflag [#allocation7], %s357
        %s359 = sand.u32 %s121, 1
        %s360 = smul.addr %s359, 128
        %s361 = scalar_lea.vmem [#allocation8], %s360
        %p362 = pneg %p134
        %p363 = pneg %p131
        %p364 = pneg %p155
        %p365 = pneg %p152
        %p366 = pneg %p176
        %p367 = pneg %p173
        %p368 = pneg %p197
        %p369 = pneg %p194
        %p370 = pneg %p223
        %p371 = pneg %p220
        %s372 = smul.u32 2, %s27
        %p373 = scmp.lt.s32.totalorder %s28, 1
        %s374 = scalar_select %p373, %s28, 1
        %s375 = scalar_lea.vmem %s2, %s374
        %s376 = smul.u32 16, %s28
        %s377 = smul.u32 2, %s27
        %v378 = vld [vmem:[#allocation3] sm:$0xff]
        %v379 = vld [vmem:[#allocation3 + $0x8] sm:$0xff]
        %v380 = vld [vmem:[%s329] sm:$0xff]
        %v381 = vld [vmem:[%s329 + $0x8] sm:$0xff]
        %v382 = vld [vmem:[%s329 + $0x10] sm:$0xff]
        %v383 = vld [vmem:[%s329 + $0x18] sm:$0xff]
        %v384 = vld [vmem:[%s329 + $0x20] sm:$0xff]
        %v385 = vld [vmem:[%s329 + $0x28] sm:$0xff]
        %v386 = vld [vmem:[%s329 + $0x30] sm:$0xff]
        %v387 = vld [vmem:[%s329 + $0x38] sm:$0xff]
        %v388 = vld [vmem:[%s329 + $0x40] sm:$0xff]
        %v389 = vld [vmem:[%s329 + $0x48] sm:$0xff]
        %v390 = vld [vmem:[%s329 + $0x50] sm:$0xff]
        %v391 = vld [vmem:[%s329 + $0x58] sm:$0xff]
        %v392 = vld [vmem:[%s329 + $0x60] sm:$0xff]
        %v393 = vld [vmem:[%s329 + $0x68] sm:$0xff]
        %v394 = vld [vmem:[%s329 + $0x70] sm:$0xff]
        %v395 = vld [vmem:[%s329 + $0x78] sm:$0xff]
        %v396 = vld [vmem:[%s375] sm:$0x1]
        %v398 = vlaneseq
        %v399 = vshrl.u32 %v398, 7
        %v400 = vsub.s32 0, %v399
        %v401 = vrot.slane %v396, %v400
        %403 = vmatprep.subr.mxu0 0.0
        %404 = vmatpush1.msra.mxu0 %v380
        %405 = vmatprep.subr.mxu0 0.0
        %406 = vmatpush1.msra.mxu0 %v381
        %407 = vmatprep.subr.mxu0 0.0
        %408 = vmatpush1.msra.mxu0 %v382
        %409 = vmatprep.subr.mxu0 0.0
        %410 = vmatpush1.msra.mxu0 %v383
        %411 = vmatprep.subr.mxu0 0.0
        %412 = vmatpush1.msra.mxu0 %v384
        %413 = vmatprep.subr.mxu0 0.0
        %414 = vmatpush1.msra.mxu0 %v385
        %415 = vmatprep.subr.mxu0 0.0
        %416 = vmatpush1.msra.mxu0 %v386
        %417 = vmatprep.subr.mxu0 0.0
        %418 = vmatpush1.msra.mxu0 %v387
        %419 = vmatprep.subr.mxu0 0.0
        %420 = vmatpush1.msra.mxu0 %v388
        %421 = vmatprep.subr.mxu0 0.0
        %422 = vmatpush1.msra.mxu0 %v389
        %423 = vmatprep.subr.mxu0 0.0
        %424 = vmatpush1.msra.mxu0 %v390
        %425 = vmatprep.subr.mxu0 0.0
        %426 = vmatpush1.msra.mxu0 %v391
        %427 = vmatprep.subr.mxu0 0.0
        %428 = vmatpush1.msra.mxu0 %v392
        %429 = vmatprep.subr.mxu0 0.0
        %430 = vmatpush1.msra.mxu0 %v393
        %431 = vmatprep.subr.mxu0 0.0
        %432 = vmatpush1.msra.mxu0 %v394
        %433 = vmatprep.subr.mxu0 0.0
        %434 = vmatpush1.msra.mxu0 %v395
        %435 = vmatprep.subr.mxu0 0.0
        %436 = vmatpush1.msra.mxu0 0.0
        %437 = vmatprep.subr.mxu0 0.0
        %438 = vmatpush1.msra.mxu0 0.0
        %439 = vmatprep.subr.mxu0 0.0
        %440 = vmatpush1.msra.mxu0 0.0
        %441 = vmatprep.subr.mxu0 0.0
        %442 = vmatpush1.msra.mxu0 0.0
        %443 = vmatprep.subr.mxu0 0.0
        %444 = vmatpush1.msra.mxu0 0.0
        %445 = vmatprep.subr.mxu0 0.0
        %446 = vmatpush1.msra.mxu0 0.0
        %447 = vmatprep.subr.mxu0 0.0
        %448 = vmatpush1.msra.mxu0 0.0
        %449 = vmatprep.subr.mxu0 0.0
        %450 = vmatpush1.msra.mxu0 0.0
        %451 = vmatprep.subr.mxu0 0.0
        %452 = vmatpush1.msra.mxu0 0.0
        %453 = vmatprep.subr.mxu0 0.0
        %454 = vmatpush1.msra.mxu0 0.0
        %455 = vmatprep.subr.mxu0 0.0
        %456 = vmatpush1.msra.mxu0 0.0
        %457 = vmatprep.subr.mxu0 0.0
        %458 = vmatpush1.msra.mxu0 0.0
        %459 = vmatprep.subr.mxu0 0.0
        %460 = vmatpush1.msra.mxu0 0.0
        %461 = vmatprep.subr.mxu0 0.0
        %462 = vmatpush1.msra.mxu0 0.0
        %463 = vmatprep.subr.mxu0 0.0
        %464 = vmatpush1.msra.mxu0 0.0
        %465 = vmatprep.subr.mxu0 0.0
        %466 = vmatpush1.msra.mxu0 0.0
        %467 = vmatprep.mubr.f32.mxu0 0.0
        %468 = vmatmul.mubr.f32.gmra.mrb[0].mxu0 %v378
        %v469 = vpop.f32.mrb[0].mxu0
        %v470 = vadd.f32 %v401, %v469
        %v471 = vpop.f32.mrb[0].mxu0
        %472 = vmatprep.mubr.f32.mxu0 0.0
        %473 = vmatmul.mubr.f32.gmra.mrb[0].mxu0 %v379
        %v474 = vpop.f32.mrb[0].mxu0
        %v475 = vadd.f32 %v401, %v474
        %v476 = vpop.f32.mrb[0].mxu0
        %477 = vdwg.mxu0
        %v478 = vmax.f32 %v470, 0.0
        %v479 = vmax.f32 %v475, 0.0
        %v480 = vld [vmem:[%s338] sm:$0xff]
        %v481 = vld [vmem:[%s338 + $0x8] sm:$0xff]
        %v482 = vld [vmem:[%s338 + $0x10] sm:$0xff]
        %v483 = vld [vmem:[%s338 + $0x18] sm:$0xff]
        %v484 = vld [vmem:[%s338 + $0x20] sm:$0xff]
        %v485 = vld [vmem:[%s338 + $0x28] sm:$0xff]
        %v486 = vld [vmem:[%s338 + $0x30] sm:$0xff]
        %v487 = vld [vmem:[%s338 + $0x38] sm:$0xff]
        %v488 = vld [vmem:[%s338 + $0x40] sm:$0xff]
        %v489 = vld [vmem:[%s338 + $0x48] sm:$0xff]
        %v490 = vld [vmem:[%s338 + $0x50] sm:$0xff]
        %v491 = vld [vmem:[%s338 + $0x58] sm:$0xff]
        %v492 = vld [vmem:[%s338 + $0x60] sm:$0xff]
        %v493 = vld [vmem:[%s338 + $0x68] sm:$0xff]
        %v494 = vld [vmem:[%s338 + $0x70] sm:$0xff]
        %v495 = vld [vmem:[%s338 + $0x78] sm:$0xff]
        %496 = vmatprep.subr.mxu0 0.0
        %497 = vmatpush1.msra.mxu0 %v480
        %498 = vmatprep.subr.mxu0 0.0
        %499 = vmatpush1.msra.mxu0 %v481
        %500 = vmatprep.subr.mxu0 0.0
        %501 = vmatpush1.msra.mxu0 %v482
        %502 = vmatprep.subr.mxu0 0.0
        %503 = vmatpush1.msra.mxu0 %v483
        %504 = vmatprep.subr.mxu0 0.0
        %505 = vmatpush1.msra.mxu0 %v484
        %506 = vmatprep.subr.mxu0 0.0
        %507 = vmatpush1.msra.mxu0 %v485
        %508 = vmatprep.subr.mxu0 0.0
        %509 = vmatpush1.msra.mxu0 %v486
        %510 = vmatprep.subr.mxu0 0.0
        %511 = vmatpush1.msra.mxu0 %v487
        %512 = vmatprep.subr.mxu0 0.0
        %513 = vmatpush1.msra.mxu0 %v488
        %514 = vmatprep.subr.mxu0 0.0
        %515 = vmatpush1.msra.mxu0 %v489
        %516 = vmatprep.subr.mxu0 0.0
        %517 = vmatpush1.msra.mxu0 %v490
        %518 = vmatprep.subr.mxu0 0.0
        %519 = vmatpush1.msra.mxu0 %v491
        %520 = vmatprep.subr.mxu0 0.0
        %521 = vmatpush1.msra.mxu0 %v492
        %522 = vmatprep.subr.mxu0 0.0
        %523 = vmatpush1.msra.mxu0 %v493
        %524 = vmatprep.subr.mxu0 0.0
        %525 = vmatpush1.msra.mxu0 %v494
        %526 = vmatprep.subr.mxu0 0.0
        %527 = vmatpush1.msra.mxu0 %v495
        %528 = vmatprep.subr.mxu0 0.0
        %529 = vmatpush1.msra.mxu0 0.0
        %530 = vmatprep.subr.mxu0 0.0
        %531 = vmatpush1.msra.mxu0 0.0
        %532 = vmatprep.subr.mxu0 0.0
        %533 = vmatpush1.msra.mxu0 0.0
        %534 = vmatprep.subr.mxu0 0.0
        %535 = vmatpush1.msra.mxu0 0.0
        %536 = vmatprep.subr.mxu0 0.0
        %537 = vmatpush1.msra.mxu0 0.0
        %538 = vmatprep.subr.mxu0 0.0
        %539 = vmatpush1.msra.mxu0 0.0
        %540 = vmatprep.subr.mxu0 0.0
        %541 = vmatpush1.msra.mxu0 0.0
        %542 = vmatprep.subr.mxu0 0.0
        %543 = vmatpush1.msra.mxu0 0.0
        %544 = vmatprep.subr.mxu0 0.0
        %545 = vmatpush1.msra.mxu0 0.0
        %546 = vmatprep.subr.mxu0 0.0
        %547 = vmatpush1.msra.mxu0 0.0
        %548 = vmatprep.subr.mxu0 0.0
        %549 = vmatpush1.msra.mxu0 0.0
        %550 = vmatprep.subr.mxu0 0.0
        %551 = vmatpush1.msra.mxu0 0.0
        %552 = vmatprep.subr.mxu0 0.0
        %553 = vmatpush1.msra.mxu0 0.0
        %554 = vmatprep.subr.mxu0 0.0
        %555 = vmatpush1.msra.mxu0 0.0
        %556 = vmatprep.subr.mxu0 0.0
        %557 = vmatpush1.msra.mxu0 0.0
        %558 = vmatprep.subr.mxu0 0.0
        %559 = vmatpush1.msra.mxu0 0.0
        %560 = vmatprep.mubr.f32.mxu0 0.0
        %561 = vmatmul.mubr.f32.gmra.mrb[0].mxu0 %v478
        %v562 = vpop.f32.mrb[0].mxu0
        %v563 = vadd.f32 0.0, %v562
        %v564 = vpop.f32.mrb[0].mxu0
        %565 = vmatprep.mubr.f32.mxu0 0.0
        %566 = vmatmul.mubr.f32.gmra.mrb[0].mxu0 %v479
        %v567 = vpop.f32.mrb[0].mxu0
        %v568 = vadd.f32 0.0, %v567
        %v569 = vpop.f32.mrb[0].mxu0
        %570 = vdwg.mxu0
        %p571 = scmp.eq.s32.totalorder %s28, 0
        // Predicated region
        $region61: #{tpu_custom_call.1} parent=47 // pred_check
          %p572 = pneg %p571
        $region62: #{tpu_custom_call.1} parent=47 // pred_check_branch
          %574 = sbr.rel (%p572) target = $region64
        $region63: #{tpu_custom_call.1} parent=47 // pred_region
          %v575 = vadd.f32 %v378, %v563
          %v576 = vadd.f32 %v379, %v568
          %577 = vst [vmem:[#allocation2] sm:$0xff] %v575
          %578 = vst [vmem:[#allocation2 + $0x8] sm:$0xff] %v576
        $region64: #{tpu_custom_call.1} parent=47 // pred_fallthru
          _
        %p579 = scmp.gt.s32.totalorder %s28, 0
        // Predicated region
        $region65: #{tpu_custom_call.1} parent=47 // pred_check
          %p580 = pneg %p579
        $region66: #{tpu_custom_call.1} parent=47 // pred_check_branch
          %582 = sbr.rel (%p580) target = $region68
        $region67: #{tpu_custom_call.1} parent=47 // pred_region
          %v583 = vld [vmem:[#allocation2] sm:$0xff]
          %v584 = vld [vmem:[#allocation2 + $0x8] sm:$0xff]
          %v585 = vadd.f32 %v583, %v563
          %v586 = vadd.f32 %v584, %v568
          %587 = vst [vmem:[#allocation2] sm:$0xff] %v585
          %588 = vst [vmem:[#allocation2 + $0x8] sm:$0xff] %v586
        $region68: #{tpu_custom_call.1} parent=47 // pred_fallthru
          _
        %p589 = scmp.eq.s32.totalorder %s28, 1
        // Predicated region
        $region69: #{tpu_custom_call.1} parent=47 // pred_check
          %p590 = pneg %p589
        $region70: #{tpu_custom_call.1} parent=47 // pred_check_branch
          %592 = sbr.rel (%p590) target = $region72
        $region71: #{tpu_custom_call.1} parent=47 // pred_region
          %v593 = vld [vmem:[#allocation2] sm:$0xff]
          %v594 = vld [vmem:[#allocation2 + $0x8] sm:$0xff]
          %v595 = vld [vmem:[%s4] sm:$0x1]
          %v597 = vlaneseq
          %v598 = vshrl.u32 %v597, 7
          %v599 = vsub.s32 0, %v598
          %v600 = vrot.slane %v595, %v599
          %v602 = vadd.f32 %v593, %v600
          %v603 = vadd.f32 %v594, %v600
          %604 = vadd.xlane.f32.xlu0 %v602
          %v605 = vpop.xlane.xlu0 %604
          %606 = vadd.xlane.f32.xlu0 %v603
          %v607 = vpop.xlane.xlu0 %606
          %v608 = vrcp.pop 128.0
          %v609 = vmul.f32 %v605, %v608
          %v610 = vmul.f32 %v607, %v608
          %v611 = vsub.f32 %v602, %v609
          %v612 = vsub.f32 %v603, %v610
          %v613 = vmul.f32 %v611, %v611
          %v614 = vmul.f32 %v612, %v612
          %615 = vadd.xlane.f32.xlu0 %v613
          %v616 = vpop.xlane.xlu0 %615
          %617 = vadd.xlane.f32.xlu0 %v614
          %v618 = vpop.xlane.xlu0 %617
          %v619 = vmul.f32 %v616, %v608
          %v620 = vmul.f32 %v618, %v608
          %v621 = vadd.f32 %v619, 1e-05
          %v622 = vadd.f32 %v620, 1e-05
          %v623 = vrsqrt.pop %v621
          %v624 = vrsqrt.pop %v622
          %v625 = vmul.f32 %v611, %v623
          %v626 = vmul.f32 %v612, %v624
          %v627 = vld [vmem:[%s5] sm:$0x1]
          %v629 = vlaneseq
          %v630 = vshrl.u32 %v629, 7
          %v631 = vsub.s32 0, %v630
          %v632 = vrot.slane %v627, %v631
          %v634 = vmul.f32 %v625, %v632
          %v635 = vmul.f32 %v626, %v632
          %v636 = vld [vmem:[%s6] sm:$0x1]
          %v638 = vlaneseq
          %v639 = vshrl.u32 %v638, 7
          %v640 = vsub.s32 0, %v639
          %v641 = vrot.slane %v636, %v640
          %v643 = vadd.f32 %v634, %v641
          %v644 = vadd.f32 %v635, %v641
          %645 = vst [vmem:[#allocation9] sm:$0xff] %v643
          %646 = vst [vmem:[#allocation9 + $0x8] sm:$0xff] %v644
        $region72: #{tpu_custom_call.1} parent=47 // pred_fallthru
          _
        // Predicated region
        $region73: #{tpu_custom_call.1} parent=47 // pred_check
          %p647 = pneg %p220
        $region74: #{tpu_custom_call.1} parent=47 // pred_check_branch
          %649 = sbr.rel (%p647) target = $region76
        $region75: #{tpu_custom_call.1} parent=47 // pred_region
          %s650 = smul.u32 2, %s27
          %s652 = ssub.s32 256, 256
          %653 = vsyncadd [#allocation5], %s652
          %s654 = smul.addr %s650, 128
          %s655 = scalar_lea.hbm %s7, %s654
          %s656 = sshll.u32 [#allocation9], 4
          %s657 = int_to_ptr.vmem [resolvable:$true] %s656
          %662 = dma.vmem_to_hbm [thread:$0]  %s657, 256, %s655, [#allocation5], 128, 128, 8
        $region76: #{tpu_custom_call.1} parent=47 // pred_fallthru
          _
        // Predicated region
        $region77: #{tpu_custom_call.1} parent=47 // pred_check
          %p663 = pneg %p220
        $region78: #{tpu_custom_call.1} parent=47 // pred_check_branch
          %665 = sbr.rel (%p663) target = $region80
        $region79: #{tpu_custom_call.1} parent=47 // pred_region
          %666 = dma.done [#allocation5], 256
        $region80: #{tpu_custom_call.1} parent=47 // pred_fallthru
          _
      $region48: #{tpu_custom_call.1} parent=5 // pred_fallthru
        _
      %p667 = scmp.le.s32.totalorder 2, %s18
      // Predicated region
      $region81: #{tpu_custom_call.1} parent=5 // pred_check
        %p668 = pneg %p667
      $region82: #{tpu_custom_call.1} parent=5 // pred_check_branch
        %670 = sbr.rel (%p668) target = $region84
      $region83: #{tpu_custom_call.1} parent=5 // pred_region
        %s671 = ssub.s32 %s18, 2
      $region84: #{tpu_custom_call.1} parent=5 // pred_fallthru
        _
    $region6: #{tpu_custom_call.1} parent=1 // loop_footer
      %s22 = sadd.s32 1, %s18
    $region7: #{tpu_custom_call.1} parent=1 // loop_footer_branch
      %17 = sbr.rel target = $region3
    $region8: #{tpu_custom_call.1} parent=1 // loop_exit
      _
    %672 = vsyncpa [#allocation4], 1
    %s673 = scalar_lea.sflag [#allocation4], 1
    %674 = vsyncpa %s673, 1
    %675 = vsyncpa [#allocation7], 1
    %s676 = scalar_lea.sflag [#allocation7], 1
    %677 = vsyncpa %s676, 1
    %678 = vsyncpa [#allocation5], 1
    %s679 = scalar_lea.sflag [#allocation5], 1
    %680 = vsyncpa %s679, 1

</llo_original>
